<compile_context>
chip_gen: v7x
topology: tpu7x:2x2x1
jax: 0.10.0
libtpu: 0.0.40
codegen_flags: <defaults>
</compile_context>

<pallas_src>
import functools

import jax
import jax.numpy as jnp
from jax import lax
from jax.experimental import pallas as pl
from jax.experimental.pallas import tpu as pltpu


TILE_ROWS = 128   # rows of the similarity matrix per grid step (raise to 256 on v6e/v7x)
TILE_COLS = 128   # column tile of the online logsumexp
_NEG_INF = -1e30  # finite "-inf": keeps the online-softmax algebra NaN-free


def ntxent_kernel(zrow_ref, zT_ref, zpos_ref, loss_ref, m_scr, l_scr, *,
                  inv_temperature, n_valid, tile_rows, tile_cols,
                  mask_pad_cols, mask_pad_rows):
    """One (row-tile, column-tile) step of the fused NT-Xent forward.

    zrow_ref: (TR, Dp) bf16  normalized rows of this row tile
    zT_ref:   (Dp, TC) bf16  normalized, pre-transposed column block (streamed)
    zpos_ref: (TR, Dp) bf16  normalized positive-pair rows for this row tile
    loss_ref: (TR, 1)  f32   per-row loss (written on the last column step only)
    m_scr / l_scr: (TR, 1) f32 online-logsumexp running max / running sum
    """
    i = pl.program_id(0)
    j = pl.program_id(1)

    @pl.when(j == 0)
    def _():
        m_scr[...] = jnp.full_like(m_scr, _NEG_INF)
        l_scr[...] = jnp.zeros_like(l_scr)

    # --- MXU: canonical [TR, Dp] @ [Dp, TC], bf16 operands, f32 accumulation ------
    sim = jnp.dot(zrow_ref[...], zT_ref[...],
                  preferred_element_type=jnp.float32)              # (TR, TC) f32
    logits = sim * inv_temperature

    # --- masking: one lane iota + one [TR,1] row-id column, single fused select ---
    col_base = j * tile_cols
    col_ids = lax.broadcasted_iota(jnp.int32, (tile_rows, tile_cols), 1)
    row_ids = i * tile_rows + lax.broadcasted_iota(jnp.int32, (tile_rows, 1), 0)
    invalid = col_ids == (row_ids - col_base)                      # self-similarity
    if mask_pad_cols:                                              # static specialization
        invalid = invalid | (col_ids >= (n_valid - col_base))
    masked = jnp.where(invalid, _NEG_INF, logits)

    # --- online logsumexp over column tiles ---------------------------------------
    m_prev = m_scr[...]
    m_new = jnp.maximum(m_prev, jnp.max(masked, axis=1, keepdims=True))
    alpha = jnp.exp(m_prev - m_new)
    l_scr[...] = alpha * l_scr[...] + jnp.sum(jnp.exp(masked - m_new),
                                              axis=1, keepdims=True)
    m_scr[...] = m_new

    # --- finalize on the last column step ------------------------------------------
    @pl.when(j == pl.num_programs(1) - 1)
    def _():
        # Positive logit as a [TR, Dp] elementwise dot (padded feature cols are 0),
        # same bf16 inputs as the MXU path, accumulated in f32 on the VPU.
        zr = zrow_ref[...].astype(jnp.float32)
        zp = zpos_ref[...].astype(jnp.float32)
        pos = jnp.sum(zr * zp, axis=1, keepdims=True) * inv_temperature   # (TR, 1)
        lse = m_scr[...] + jnp.log(l_scr[...])
        loss = lse - pos
        if mask_pad_rows:                                          # static specialization
            loss = jnp.where(row_ids < n_valid, loss, 0.0)
        loss_ref[...] = loss


def ntxent_loss(proj_i, proj_j, temperature, *,
                tile_rows=TILE_ROWS, tile_cols=TILE_COLS):
    """NTXentLoss forward: proj_i, proj_j are [B, D]; returns a scalar loss."""
    B, D = proj_i.shape
    if B == 0:
        return jnp.float32(0.0)
    n_valid = 2 * B

    # --- hoisted prologue (runs once, plain XLA): normalize, roll, pad, cast, T ----
    r = jnp.concatenate([proj_i, proj_j], axis=0).astype(jnp.float32)     # (2B, D)
    ss = jnp.sum(r * r, axis=1, keepdims=True)
    # r / max(||r||, 1e-8): matches torch CosineSimilarity up to clamping each norm
    # (instead of the product of norms) at eps — identical for non-degenerate inputs.
    z = r * lax.rsqrt(jnp.maximum(ss, 1e-16))
    z_pos = jnp.roll(z, shift=-B, axis=0)      # row g paired with row (g + B) mod 2B

    step = max(tile_rows, tile_cols)
    assert step % min(tile_rows, tile_cols) == 0
    Np = pl.cdiv(n_valid, step) * step         # pad rows/cols of the sim matrix
    Dp = pl.cdiv(D, 128) * 128                 # lane-dense feature dim

    def pad_cast(x):
        out = jnp.zeros((Np, Dp), jnp.float32).at[:n_valid, :D].set(x)
        return out.astype(jnp.bfloat16)

    z_p = pad_cast(z)            # (Np, Dp) bf16 — MXU LHS row tiles + pos-dot operand
    z_pos_p = pad_cast(z_pos)    # (Np, Dp) bf16
    z_T = z_p.T                  # (Dp, Np) bf16 — one-time transpose: canonical MXU RHS

    num_row_tiles = Np // tile_rows
    num_col_tiles = Np // tile_cols

    kernel = functools.partial(
        ntxent_kernel,
        inv_temperature=1.0 / float(temperature),
        n_valid=n_valid,
        tile_rows=tile_rows,
        tile_cols=tile_cols,
        mask_pad_cols=(Np != n_valid),
        mask_pad_rows=(Np != n_valid),
    )

    per_row = pl.pallas_call(
        kernel,
        out_shape=jax.ShapeDtypeStruct((Np, 1), jnp.float32),
        grid=(num_row_tiles, num_col_tiles),
        in_specs=[
            pl.BlockSpec((tile_rows, Dp), lambda i, j: (i, 0)),   # z row tile
            pl.BlockSpec((Dp, tile_cols), lambda i, j: (0, j)),   # z_T column stream
            pl.BlockSpec((tile_rows, Dp), lambda i, j: (i, 0)),   # positive rows
        ],
        out_specs=pl.BlockSpec((tile_rows, 1), lambda i, j: (i, 0)),
        scratch_shapes=[
            pltpu.VMEM((tile_rows, 1), jnp.float32),   # running max m
            pltpu.VMEM((tile_rows, 1), jnp.float32),   # running sum l
        ],
        compiler_params=pltpu.CompilerParams(
            dimension_semantics=("parallel", "arbitrary"),
            vmem_limit_bytes=32 * 1024 * 1024,
        ),
    )(z_p, z_T, z_pos_p)

    # CrossEntropyLoss(reduction='sum') / (2 * batch_size)
    return jnp.sum(per_row) / n_valid


def ntxent_reference(proj_i, proj_j, temperature):
    """Pure-JAX (f32) mirror of the PyTorch NTXentLoss forward."""
    r = jnp.concatenate([proj_i, proj_j], axis=0)
    n2 = r.shape[0]
    b = n2 // 2
    norms = jnp.sqrt(jnp.sum(r * r, axis=1))
    sim = (r @ r.T) / jnp.maximum(norms[:, None] * norms[None, :], 1e-8)
    sim = jnp.where(jnp.eye(n2, dtype=bool), -jnp.inf, sim)
    logits = sim / temperature
    labels = jnp.concatenate([jnp.arange(b, n2), jnp.arange(b)])
    lse = jax.scipy.special.logsumexp(logits, axis=1)
    loss = jnp.sum(lse - logits[jnp.arange(n2), labels])
    return loss / n2


if __name__ == "__main__":
    batch, dim = 96, 48          # deliberately NOT multiples of 8/128: exercises padding
    temperature = 0.5

    key = jax.random.PRNGKey(0)
    ki, kj = jax.random.split(key)
    proj_i = jax.random.normal(ki, (batch, dim), jnp.float32)
    proj_j = jax.random.normal(kj, (batch, dim), jnp.float32)

    out = ntxent_loss(proj_i, proj_j, temperature)
    out = jax.block_until_ready(out)

    ref = ntxent_reference(proj_i, proj_j, temperature)
    assert out.shape == (), f"expected scalar loss, got {out.shape}"
    assert jnp.isfinite(out), "loss is not finite"
    # bf16 MXU operands vs. f32 reference: tolerance loosened per review.
    assert jnp.allclose(out, ref, atol=5e-2, rtol=1e-2), f"mismatch: {out} vs {ref}"

    print("KERNEL_OK")
</pallas_src>

<mosaic_0001>
module attributes {stable_mosaic.version = 11 : i64} {
  func.func @ntxent_kernel(%arg0: i32, %arg1: i32, %arg2: memref<128x128xbf16, #tpu.memory_space<vmem>>, %arg3: memref<128x128xbf16, #tpu.memory_space<vmem>>, %arg4: memref<128x128xbf16, #tpu.memory_space<vmem>>, %arg5: memref<128x1xf32, #tpu.memory_space<vmem>>, %arg6: memref<128x1xf32, #tpu.memory_space<vmem>>, %arg7: memref<128x1xf32, #tpu.memory_space<vmem>>) attributes {dimension_semantics = [#tpu.dimension_semantics<parallel>, #tpu.dimension_semantics<arbitrary>], iteration_bounds = array<i64: 2, 2>, scalar_prefetch = 0 : i64, scratch_operands = 2 : i64, tpu.core_type = #tpu.core_type<tc>, window_params = [{transform_indices = @transform_0, window_bounds = array<i64: 128, 128>}, {transform_indices = @transform_1, window_bounds = array<i64: 128, 128>}, {transform_indices = @transform_2, window_bounds = array<i64: 128, 128>}, {transform_indices = @transform_3, window_bounds = array<i64: 128, 1>}]} {
    %c0_i32 = arith.constant 0 : i32
    %0 = arith.cmpi eq, %arg1, %c0_i32 : i32
    %1 = arith.extui %0 : i1 to i32
    %c0_i32_0 = arith.constant 0 : i32
    %2 = arith.cmpi ne, %1, %c0_i32_0 : i32
    scf.if %2 {
      %cst_18 = arith.constant -1.000000e+30 : f32
      %43 = vector.broadcast %cst_18 : f32 to vector<128x1xf32>
      %c0_19 = arith.constant 0 : index
      %c0_20 = arith.constant 0 : index
      %44 = vector.load %arg6[%c0_19, %c0_20] : memref<128x1xf32, #tpu.memory_space<vmem>>, vector<128x1xf32>
      tpu.vector_store %arg6[%c0_19, %c0_20], %43 {strides = array<i32>} : memref<128x1xf32, #tpu.memory_space<vmem>>, vector<128x1xf32>,
      %cst_21 = arith.constant 0.000000e+00 : f32
      %45 = vector.broadcast %cst_21 : f32 to vector<128x1xf32>
      %c0_22 = arith.constant 0 : index
      %c0_23 = arith.constant 0 : index
      %46 = vector.load %arg7[%c0_22, %c0_23] : memref<128x1xf32, #tpu.memory_space<vmem>>, vector<128x1xf32>
      tpu.vector_store %arg7[%c0_22, %c0_23], %45 {strides = array<i32>} : memref<128x1xf32, #tpu.memory_space<vmem>>, vector<128x1xf32>,
    } else {
    }
    %c0 = arith.constant 0 : index
    %c0_1 = arith.constant 0 : index
    %3 = vector.load %arg2[%c0, %c0_1] : memref<128x128xbf16, #tpu.memory_space<vmem>>, vector<128x128xbf16>
    %c0_2 = arith.constant 0 : index
    %c0_3 = arith.constant 0 : index
    %4 = vector.load %arg3[%c0_2, %c0_3] : memref<128x128xbf16, #tpu.memory_space<vmem>>, vector<128x128xbf16>
    %cst = arith.constant dense<0.000000e+00> : vector<128x128xf32>
    %5 = tpu.matmul %3, %4, %cst {dimension_numbers = #tpu.dot_dimension_numbers<[1], [0], [0], [1], [0, 0, 1, 1], [], []>} : vector<128x128xbf16>, vector<128x128xbf16>, vector<128x128xf32> -> vector<128x128xf32>
    %cst_4 = arith.constant 2.000000e+00 : f32
    %6 = vector.broadcast %cst_4 : f32 to vector<128x128xf32>
    %7 = arith.mulf %5, %6 : vector<128x128xf32>
    %c128_i32 = arith.constant 128 : i32
    %8 = arith.muli %arg1, %c128_i32 : i32
    %9 = tpu.iota {dimensions = array<i32: 1>} : vector<128x128xi32>
    %c128_i32_5 = arith.constant 128 : i32
    %10 = arith.muli %arg0, %c128_i32_5 : i32
    %11 = tpu.iota {dimensions = array<i32: 0>} : vector<128x1xi32>
    %12 = vector.broadcast %10 : i32 to vector<128x1xi32>
    %13 = arith.addi %12, %11 : vector<128x1xi32>
    %14 = vector.broadcast %8 : i32 to vector<128x1xi32>
    %15 = arith.subi %13, %14 : vector<128x1xi32>
    %16 = vector.broadcast %15 : vector<128x1xi32> to vector<128x128xi32>
    %17 = arith.cmpi eq, %9, %16 : vector<128x128xi32>
    %c192_i32 = arith.constant 192 : i32
    %18 = arith.subi %c192_i32, %8 : i32
    %19 = vector.broadcast %18 : i32 to vector<128x128xi32>
    %20 = arith.cmpi sge, %9, %19 : vector<128x128xi32>
    %21 = arith.ori %17, %20 : vector<128x128xi1>
    %cst_6 = arith.constant -1.000000e+30 : f32
    %22 = vector.broadcast %cst_6 : f32 to vector<128x128xf32>
    %23 = arith.select %21, %22, %7 : vector<128x128xi1>, vector<128x128xf32>
    %c0_7 = arith.constant 0 : index
    %c0_8 = arith.constant 0 : index
    %24 = vector.load %arg6[%c0_7, %c0_8] : memref<128x1xf32, #tpu.memory_space<vmem>>, vector<128x1xf32>
    %cst_9 = arith.constant dense<0xFF800000> : vector<128xf32>
    %25 = vector.multi_reduction <maximumf>, %23, %cst_9 [1] : vector<128x128xf32> to vector<128xf32>
    %26 = vector.shape_cast %25 : vector<128xf32> to vector<128x1xf32>
    %27 = arith.maximumf %24, %26 : vector<128x1xf32>
    %28 = arith.subf %24, %27 : vector<128x1xf32>
    %29 = math.exp %28 : vector<128x1xf32>
    %c0_10 = arith.constant 0 : index
    %c0_11 = arith.constant 0 : index
    %30 = vector.load %arg7[%c0_10, %c0_11] : memref<128x1xf32, #tpu.memory_space<vmem>>, vector<128x1xf32>
    %31 = arith.mulf %29, %30 : vector<128x1xf32>
    %32 = vector.broadcast %27 : vector<128x1xf32> to vector<128x128xf32>
    %33 = arith.subf %23, %32 : vector<128x128xf32>
    %34 = math.exp %33 : vector<128x128xf32>
    %cst_12 = arith.constant dense<0.000000e+00> : vector<128xf32>
    %35 = vector.multi_reduction <add>, %34, %cst_12 [1] : vector<128x128xf32> to vector<128xf32>
    %36 = vector.shape_cast %35 : vector<128xf32> to vector<128x1xf32>
    %37 = arith.addf %31, %36 : vector<128x1xf32>
    %c0_13 = arith.constant 0 : index
    %c0_14 = arith.constant 0 : index
    %38 = vector.load %arg7[%c0_13, %c0_14] : memref<128x1xf32, #tpu.memory_space<vmem>>, vector<128x1xf32>
    tpu.vector_store %arg7[%c0_13, %c0_14], %37 {strides = array<i32>} : memref<128x1xf32, #tpu.memory_space<vmem>>, vector<128x1xf32>,
    %c0_15 = arith.constant 0 : index
    %c0_16 = arith.constant 0 : index
    %39 = vector.load %arg6[%c0_15, %c0_16] : memref<128x1xf32, #tpu.memory_space<vmem>>, vector<128x1xf32>
    tpu.vector_store %arg6[%c0_15, %c0_16], %27 {strides = array<i32>} : memref<128x1xf32, #tpu.memory_space<vmem>>, vector<128x1xf32>,
    %c1_i32 = arith.constant 1 : i32
    %40 = arith.cmpi eq, %arg1, %c1_i32 : i32
    %41 = arith.extui %40 : i1 to i32
    %c0_i32_17 = arith.constant 0 : i32
    %42 = arith.cmpi ne, %41, %c0_i32_17 : i32
    scf.if %42 {
      %c0_18 = arith.constant 0 : index
      %c0_19 = arith.constant 0 : index
      %43 = vector.load %arg2[%c0_18, %c0_19] : memref<128x128xbf16, #tpu.memory_space<vmem>>, vector<128x128xbf16>
      %44 = arith.extf %43 : vector<128x128xbf16> to vector<128x128xf32>
      %c0_20 = arith.constant 0 : index
      %c0_21 = arith.constant 0 : index
      %45 = vector.load %arg4[%c0_20, %c0_21] : memref<128x128xbf16, #tpu.memory_space<vmem>>, vector<128x128xbf16>
      %46 = arith.extf %45 : vector<128x128xbf16> to vector<128x128xf32>
      %47 = arith.mulf %44, %46 : vector<128x128xf32>
      %cst_22 = arith.constant dense<0.000000e+00> : vector<128xf32>
      %48 = vector.multi_reduction <add>, %47, %cst_22 [1] : vector<128x128xf32> to vector<128xf32>
      %49 = vector.shape_cast %48 : vector<128xf32> to vector<128x1xf32>
      %cst_23 = arith.constant 2.000000e+00 : f32
      %50 = vector.broadcast %cst_23 : f32 to vector<128x1xf32>
      %51 = arith.mulf %49, %50 : vector<128x1xf32>
      %c0_24 = arith.constant 0 : index
      %c0_25 = arith.constant 0 : index
      %52 = vector.load %arg6[%c0_24, %c0_25] : memref<128x1xf32, #tpu.memory_space<vmem>>, vector<128x1xf32>
      %c0_26 = arith.constant 0 : index
      %c0_27 = arith.constant 0 : index
      %53 = vector.load %arg7[%c0_26, %c0_27] : memref<128x1xf32, #tpu.memory_space<vmem>>, vector<128x1xf32>
      %54 = math.log %53 : vector<128x1xf32>
      %55 = arith.addf %52, %54 : vector<128x1xf32>
      %56 = arith.subf %55, %51 : vector<128x1xf32>
      %c192_i32_28 = arith.constant 192 : i32
      %57 = vector.broadcast %c192_i32_28 : i32 to vector<128x1xi32>
      %58 = arith.cmpi slt, %13, %57 : vector<128x1xi32>
      %cst_29 = arith.constant 0.000000e+00 : f32
      %59 = vector.broadcast %cst_29 : f32 to vector<128x1xf32>
      %60 = arith.select %58, %56, %59 : vector<128x1xi1>, vector<128x1xf32>
      %c0_30 = arith.constant 0 : index
      %c0_31 = arith.constant 0 : index
      %61 = vector.load %arg5[%c0_30, %c0_31] : memref<128x1xf32, #tpu.memory_space<vmem>>, vector<128x1xf32>
      tpu.vector_store %arg5[%c0_30, %c0_31], %60 {strides = array<i32>} : memref<128x1xf32, #tpu.memory_space<vmem>>, vector<128x1xf32>,
    } else {
    }
    return
  }
  func.func @transform_0(%arg0: i32, %arg1: i32) -> (i32, i32) {
    %c0_i32 = arith.constant 0 : i32
    %c0_i32_0 = arith.constant 0 : i32
    return %arg0, %c0_i32 : i32, i32
  }
  func.func @transform_1(%arg0: i32, %arg1: i32) -> (i32, i32) {
    %c0_i32 = arith.constant 0 : i32
    %c0_i32_0 = arith.constant 0 : i32
    return %c0_i32, %arg1 : i32, i32
  }
  func.func @transform_2(%arg0: i32, %arg1: i32) -> (i32, i32) {
    %c0_i32 = arith.constant 0 : i32
    %c0_i32_0 = arith.constant 0 : i32
    return %arg0, %c0_i32 : i32, i32
  }
  func.func @transform_3(%arg0: i32, %arg1: i32) -> (i32, i32) {
    %c0_i32 = arith.constant 0 : i32
    %c0_i32_0 = arith.constant 0 : i32
    return %arg0, %c0_i32 : i32, i32
  }
}

</mosaic_0001>

<llo_original>
// kernel: tpu_custom_call.1
$region0: #{tpu_custom_call.1}
  #allocation0 [shape = 'u32[]', space=smem, size = 0x4, offset = 0x4, fixed_abs, tag = 'smem constant byte address 0x4 - core index']
  #allocation1 [shape = 'u32[144,128]{1,0:T(1,128)}', space=vmem, size = 0x12000, scoped, tag = 'internal scratch']
  #allocation2 [shape = 'f32[128,1]{1,0:T(8,128)}', space=vmem, size = 0x10000, scoped, tag = 'scratch operand']
  #allocation3 [shape = 'f32[128,1]{1,0:T(8,128)}', space=vmem, size = 0x10000, scoped, tag = 'scratch operand']
  %s0 = inlined_call_operand.hbm [shape: bf16[256,128], index: 0, kind: input, shape index: {}]
  %s1 = inlined_call_operand.hbm [shape: bf16[128,256], index: 1, kind: input, shape index: {}]
  %s2 = inlined_call_operand.hbm [shape: bf16[256,128], index: 2, kind: input, shape index: {}]
  %s3 = inlined_call_operand.vmem [shape: f32[256,1], index: 3, kind: output, shape index: {}]
  %s4 = sld [smem:[#allocation0]]
  $region65: #{tpu_custom_call.1} parent=0
    _
  %s6 = ssub.s32 1, %s4
  %s7 = scalar_select 0, %s6, %s4
  $region1: #{tpu_custom_call.1} parent=0
    #allocation4 [shape = 'u8[65536]{0}', space=vmem, size = 0x10000, scoped, tag = 'input window, operand 0']
    #allocation5 [shape = 's32[2]{0}', space=sflag, size = 0x8, scoped, tag = 'scoped memory for tpu_custom_call.1']
    #allocation6 [shape = 'u8[65536]{0}', space=vmem, size = 0x10000, scoped, tag = 'input window, operand 1']
    #allocation7 [shape = 's32[2]{0}', space=sflag, size = 0x8, scoped, tag = 'scoped memory for tpu_custom_call.1']
    #allocation8 [shape = 'u8[65536]{0}', space=vmem, size = 0x10000, scoped, tag = 'input window, operand 2']
    %8 = vsyncpa [#allocation5], 0
    %s9 = scalar_lea.sflag [#allocation5], 1
    %10 = vsyncpa %s9, 0
    %11 = vsyncpa [#allocation7], 0
    %s12 = scalar_lea.sflag [#allocation7], 1
    %13 = vsyncpa %s12, 0
    loop: start=0, step=1, limit=6
    $region2: #{tpu_custom_call.1} parent=1 // loop_pre_header
      _
    $region3: #{tpu_custom_call.1} parent=1 // loop_header
      %s15 = sphi 0, %s19
      %p16 = scmp.ge.s32.totalorder %s15, 6
      %s22 = sphi 0, %s34
      %s23 = sphi 0, %s30
      %s24 = sphi 0, %s22
      %s25 = sphi 0, %s23
      %s26 = sphi 0, %s24
      %s27 = sphi 0, %s25
      %s37 = sphi 0, %s39
      %s40 = sphi 0, %s37
      %s41 = sphi 0, %s40
      %s57 = sphi 0, %s41
      %s63 = sphi 0, %s65
      %s66 = sphi 0, %s63
      %s67 = sphi 0, %s66
      %s83 = sphi 0, %s67
      %s89 = sphi 0, %s91
      %s92 = sphi 0, %s89
      %s93 = sphi 0, %s92
      %s109 = sphi 0, %s93
      %s115 = sphi 0, %s117
      %s118 = sphi 0, %s115
      %s119 = sphi 0, %s118
      %s135 = sphi 0, %s119
    $region4: #{tpu_custom_call.1} parent=1 // loop_header_branch
      %18 = sbr.rel (%p16) target = $region8
    $region5: #{tpu_custom_call.1} parent=1 // loop_body
      %s20 = ssub.s32 %s15, 1
      %s21 = ssub.s32 %s15, 2
      %s28 = sadd.s32 1, %s23
      %p29 = scmp.ge.s32.totalorder %s28, 2
      %s30 = scalar_select %p29, 0, %s28
      %s31 = sadd.s32 1, %s22
      %s32 = scalar_select %p29, %s31, %s22
      %p33 = scmp.ge.s32.totalorder %s32, 2
      %s34 = scalar_select %p33, 0, %s32
      %s35 = ssub.s32 %s22, %s34
      %p36 = scmp.eq.s32.totalorder %s35, 0
      %s38 = sadd.s32 %s37, 1
      %s39 = scalar_select %p36, %s37, %s38
      %p42 = pneg %p36
      %p43 = scmp.eq.s32.totalorder %s15, 3
      %p44 = por %p42, %p43
      %p45 = scmp.ne.s32.totalorder %s37, %s40
      %p46 = scmp.eq.s32.totalorder %s15, 0
      %p47 = por %p45, %p46
      %p48 = scmp.ne.s32.totalorder %s37, %s40
      %p49 = scmp.eq.s32.totalorder %s20, 3
      %p50 = por %p48, %p49
      %p51 = scmp.ne.s32.totalorder %s40, %s41
      %p52 = scmp.eq.s32.totalorder %s20, 0
      %p53 = por %p51, %p52
      %p54 = scmp.ne.s32.totalorder %s40, %s41
      %p55 = scmp.eq.s32.totalorder %s21, 3
      %p56 = por %p54, %p55
      %p58 = scmp.ne.s32.totalorder %s41, %s57
      %p59 = scmp.eq.s32.totalorder %s21, 0
      %p60 = por %p58, %p59
      %s61 = ssub.s32 %s23, %s30
      %p62 = scmp.eq.s32.totalorder %s61, 0
      %s64 = sadd.s32 %s63, 1
      %s65 = scalar_select %p62, %s63, %s64
      %p68 = pneg %p62
      %p69 = scmp.eq.s32.totalorder %s15, 3
      %p70 = por %p68, %p69
      %p71 = scmp.ne.s32.totalorder %s63, %s66
      %p72 = scmp.eq.s32.totalorder %s15, 0
      %p73 = por %p71, %p72
      %p74 = scmp.ne.s32.totalorder %s63, %s66
      %p75 = scmp.eq.s32.totalorder %s20, 3
      %p76 = por %p74, %p75
      %p77 = scmp.ne.s32.totalorder %s66, %s67
      %p78 = scmp.eq.s32.totalorder %s20, 0
      %p79 = por %p77, %p78
      %p80 = scmp.ne.s32.totalorder %s66, %s67
      %p81 = scmp.eq.s32.totalorder %s21, 3
      %p82 = por %p80, %p81
      %p84 = scmp.ne.s32.totalorder %s67, %s83
      %p85 = scmp.eq.s32.totalorder %s21, 0
      %p86 = por %p84, %p85
      %s87 = ssub.s32 %s22, %s34
      %p88 = scmp.eq.s32.totalorder %s87, 0
      %s90 = sadd.s32 %s89, 1
      %s91 = scalar_select %p88, %s89, %s90
      %p94 = pneg %p88
      %p95 = scmp.eq.s32.totalorder %s15, 3
      %p96 = por %p94, %p95
      %p97 = scmp.ne.s32.totalorder %s89, %s92
      %p98 = scmp.eq.s32.totalorder %s15, 0
      %p99 = por %p97, %p98
      %p100 = scmp.ne.s32.totalorder %s89, %s92
      %p101 = scmp.eq.s32.totalorder %s20, 3
      %p102 = por %p100, %p101
      %p103 = scmp.ne.s32.totalorder %s92, %s93
      %p104 = scmp.eq.s32.totalorder %s20, 0
      %p105 = por %p103, %p104
      %p106 = scmp.ne.s32.totalorder %s92, %s93
      %p107 = scmp.eq.s32.totalorder %s21, 3
      %p108 = por %p106, %p107
      %p110 = scmp.ne.s32.totalorder %s93, %s109
      %p111 = scmp.eq.s32.totalorder %s21, 0
      %p112 = por %p110, %p111
      %s113 = ssub.s32 %s22, %s34
      %p114 = scmp.eq.s32.totalorder %s113, 0
      %s116 = sadd.s32 %s115, 1
      %s117 = scalar_select %p114, %s115, %s116
      %p120 = pneg %p114
      %p121 = scmp.eq.s32.totalorder %s15, 3
      %p122 = por %p120, %p121
      %p123 = scmp.ne.s32.totalorder %s115, %s118
      %p124 = scmp.eq.s32.totalorder %s15, 0
      %p125 = por %p123, %p124
      %p126 = scmp.ne.s32.totalorder %s115, %s118
      %p127 = scmp.eq.s32.totalorder %s20, 3
      %p128 = por %p126, %p127
      %p129 = scmp.ne.s32.totalorder %s118, %s119
      %p130 = scmp.eq.s32.totalorder %s20, 0
      %p131 = por %p129, %p130
      %p132 = scmp.ne.s32.totalorder %s118, %s119
      %p133 = scmp.eq.s32.totalorder %s21, 3
      %p134 = por %p132, %p133
      %p136 = scmp.ne.s32.totalorder %s119, %s135
      %p137 = scmp.eq.s32.totalorder %s21, 0
      %p138 = por %p136, %p137
      %p139 = scmp.le.s32.totalorder 1, %s15
      %p140 = scmp.lt.s32.totalorder %s15, 5
      %p141 = pnand %p139, %p140
      %p142 = pneg %p141
      // Predicated region
      $region9: #{tpu_custom_call.1} parent=5 // pred_check
        _
      $region10: #{tpu_custom_call.1} parent=5 // pred_check_branch
        %144 = sbr.rel (%p141) target = $region12
      $region11: #{tpu_custom_call.1} parent=5 // pred_region
        %s145 = ssub.s32 %s15, 1
      $region12: #{tpu_custom_call.1} parent=5 // pred_fallthru
        _
      %p146 = scmp.lt.s32.totalorder %s15, 4
      // Predicated region
      $region13: #{tpu_custom_call.1} parent=5 // pred_check
        %p147 = pneg %p146
      $region14: #{tpu_custom_call.1} parent=5 // pred_check_branch
        %149 = sbr.rel (%p147) target = $region16
      $region15: #{tpu_custom_call.1} parent=5 // pred_region
        // Predicated region
        $region17: #{tpu_custom_call.1} parent=15 // pred_check
          %p150 = pneg %p47
        $region18: #{tpu_custom_call.1} parent=15 // pred_check_branch
          %152 = sbr.rel (%p150) target = $region20
        $region19: #{tpu_custom_call.1} parent=15 // pred_region
          %s153 = sand.u32 %s37, 1
          %s154 = scalar_lea.sflag [#allocation5], %s153
          %s155 = sand.u32 %s37, 1
          %s156 = smul.addr %s155, 64
          %s157 = scalar_lea.vmem [#allocation4], %s156
          %s158 = smul.u32 16, %s22
          %s160 = ssub.s32 1024, 1024
          %161 = vsyncadd %s154, %s160
          %s162 = smul.addr %s158, 64
          %s163 = scalar_lea.hbm %s0, %s162
          %s164 = sshll.u32 %s157, 4
          %s165 = int_to_ptr.vmem [resolvable:$true] %s164
          %170 = dma.hbm_to_vmem [thread:$0]  %s163, 1024, %s165, %s154, 64, 64, 4
        $region20: #{tpu_custom_call.1} parent=15 // pred_fallthru
          _
        // Predicated region
        $region21: #{tpu_custom_call.1} parent=15 // pred_check
          %p171 = pneg %p73
        $region22: #{tpu_custom_call.1} parent=15 // pred_check_branch
          %173 = sbr.rel (%p171) target = $region24
        $region23: #{tpu_custom_call.1} parent=15 // pred_region
          %s174 = sand.u32 %s15, 1
          %s175 = scalar_lea.sflag [#allocation7], %s174
          %s176 = sand.u32 %s63, 1
          %s177 = smul.addr %s176, 64
          %s178 = scalar_lea.vmem [#allocation6], %s177
          %s180 = ssub.s32 1024, 1024
          %181 = vsyncadd %s175, %s180
          %s182 = smul.addr %s23, 64
          %s183 = scalar_lea.hbm %s1, %s182
          %s184 = sshll.u32 %s178, 4
          %s185 = int_to_ptr.vmem [resolvable:$true] %s184
          %190 = dma.hbm_to_vmem [thread:$0]  %s183, 1024, %s185, %s175, 128, 64, 4
        $region24: #{tpu_custom_call.1} parent=15 // pred_fallthru
          _
        // Predicated region
        $region25: #{tpu_custom_call.1} parent=15 // pred_check
          %p191 = pneg %p99
        $region26: #{tpu_custom_call.1} parent=15 // pred_check_branch
          %193 = sbr.rel (%p191) target = $region28
        $region27: #{tpu_custom_call.1} parent=15 // pred_region
          %s194 = sand.u32 %s15, 1
          %s195 = scalar_lea.sflag [#allocation7], %s194
          %s196 = sand.u32 %s89, 1
          %s197 = smul.addr %s196, 64
          %s198 = scalar_lea.vmem [#allocation8], %s197
          %s199 = smul.u32 16, %s22
          %s201 = ssub.s32 1024, 1024
          %202 = vsyncadd %s195, %s201
          %s203 = smul.addr %s199, 64
          %s204 = scalar_lea.hbm %s2, %s203
          %s205 = sshll.u32 %s198, 4
          %s206 = int_to_ptr.vmem [resolvable:$true] %s205
          %211 = dma.hbm_to_vmem [thread:$0]  %s204, 1024, %s206, %s195, 64, 64, 4
        $region28: #{tpu_custom_call.1} parent=15 // pred_fallthru
          _
      $region16: #{tpu_custom_call.1} parent=5 // pred_fallthru
        _
      %p212 = scmp.le.s32.totalorder 1, %s15
      %p213 = scmp.lt.s32.totalorder %s15, 5
      %p214 = pnand %p212, %p213
      %p215 = pneg %p214
      // Predicated region
      $region29: #{tpu_custom_call.1} parent=5 // pred_check
        _
      $region30: #{tpu_custom_call.1} parent=5 // pred_check_branch
        %217 = sbr.rel (%p214) target = $region32
      $region31: #{tpu_custom_call.1} parent=5 // pred_region
        %s218 = ssub.s32 %s15, 1
        %s219 = sand.u32 %s40, 1
        %s220 = scalar_lea.sflag [#allocation5], %s219
        %s221 = sand.u32 %s40, 1
        %s222 = smul.addr %s221, 64
        %s223 = scalar_lea.vmem [#allocation4], %s222
        // Predicated region
        $region33: #{tpu_custom_call.1} parent=31 // pred_check
          %p224 = pneg %p53
        $region34: #{tpu_custom_call.1} parent=31 // pred_check_branch
          %226 = sbr.rel (%p224) target = $region36
        $region35: #{tpu_custom_call.1} parent=31 // pred_region
          %227 = dma.done %s220, 1024
        $region36: #{tpu_custom_call.1} parent=31 // pred_fallthru
          _
        %s228 = sand.u32 %s20, 1
        %s229 = scalar_lea.sflag [#allocation7], %s228
        %s230 = sand.u32 %s66, 1
        %s231 = smul.addr %s230, 64
        %s232 = scalar_lea.vmem [#allocation6], %s231
        // Predicated region
        $region37: #{tpu_custom_call.1} parent=31 // pred_check
          %p233 = pneg %p79
        $region38: #{tpu_custom_call.1} parent=31 // pred_check_branch
          %235 = sbr.rel (%p233) target = $region40
        $region39: #{tpu_custom_call.1} parent=31 // pred_region
          %236 = dma.done %s229, 1024
        $region40: #{tpu_custom_call.1} parent=31 // pred_fallthru
          _
        %s237 = sand.u32 %s20, 1
        %s238 = scalar_lea.sflag [#allocation7], %s237
        %s239 = sand.u32 %s92, 1
        %s240 = smul.addr %s239, 64
        %s241 = scalar_lea.vmem [#allocation8], %s240
        // Predicated region
        $region41: #{tpu_custom_call.1} parent=31 // pred_check
          %p242 = pneg %p105
        $region42: #{tpu_custom_call.1} parent=31 // pred_check_branch
          %244 = sbr.rel (%p242) target = $region44
        $region43: #{tpu_custom_call.1} parent=31 // pred_region
          %245 = dma.done %s238, 1024
        $region44: #{tpu_custom_call.1} parent=31 // pred_fallthru
          _
        %s246 = sand.u32 %s40, 1
        %s247 = scalar_lea.sflag [#allocation5], %s246
        %s248 = sand.u32 %s40, 1
        %s249 = smul.addr %s248, 64
        %s250 = scalar_lea.vmem [#allocation4], %s249
        %p251 = pneg %p53
        %p252 = pneg %p50
        %s253 = sand.u32 %s20, 1
        %s254 = scalar_lea.sflag [#allocation7], %s253
        %s255 = sand.u32 %s66, 1
        %s256 = smul.addr %s255, 64
        %s257 = scalar_lea.vmem [#allocation6], %s256
        %p258 = pneg %p79
        %p259 = pneg %p76
        %s260 = sand.u32 %s20, 1
        %s261 = scalar_lea.sflag [#allocation7], %s260
        %s262 = sand.u32 %s92, 1
        %s263 = smul.addr %s262, 64
        %s264 = scalar_lea.vmem [#allocation8], %s263
        %p265 = pneg %p105
        %p266 = pneg %p102
        %p267 = pneg %p131
        %p268 = pneg %p128
        %s269 = smul.u32 16, %s24
        %p270 = scmp.lt.s32.totalorder %s269, 31
        %s271 = scalar_select %p270, %s269, 31
        %s272 = smul.addr %s271, 8
        %s273 = scalar_lea.vmem %s3, %s272
        %s274 = smul.u32 16, %s24
        %s275 = smul.u32 16, %s24
        %s276 = smul.u32 16, %s24
        %p277 = scmp.lt.s32.totalorder %s276, 31
        %s278 = scalar_select %p277, %s276, 31
        %s279 = smul.addr %s278, 8
        %s280 = scalar_lea.vmem %s3, %s279
        %s281 = smul.u32 16, %s24
        %p283 = scmp.eq.s32.totalorder %s25, 0
        // Predicated region
        $region45: #{tpu_custom_call.1} parent=31 // pred_check
          %p284 = pneg %p283
        $region46: #{tpu_custom_call.1} parent=31 // pred_check_branch
          %286 = sbr.rel (%p284) target = $region48
        $region47: #{tpu_custom_call.1} parent=31 // pred_region
          %vm287 = vcmask 7168
          %288 = vst.msk [vmem:[#allocation2] sm:$0xff] %vm287, -1e+30
          %289 = vst.msk [vmem:[#allocation2 + $0x8] sm:$0xff] %vm287, -1e+30
          %290 = vst.msk [vmem:[#allocation2 + $0x10] sm:$0xff] %vm287, -1e+30
          %291 = vst.msk [vmem:[#allocation2 + $0x18] sm:$0xff] %vm287, -1e+30
          %292 = vst.msk [vmem:[#allocation2 + $0x20] sm:$0xff] %vm287, -1e+30
          %293 = vst.msk [vmem:[#allocation2 + $0x28] sm:$0xff] %vm287, -1e+30
          %294 = vst.msk [vmem:[#allocation2 + $0x30] sm:$0xff] %vm287, -1e+30
          %295 = vst.msk [vmem:[#allocation2 + $0x38] sm:$0xff] %vm287, -1e+30
          %296 = vst.msk [vmem:[#allocation2 + $0x40] sm:$0xff] %vm287, -1e+30
          %297 = vst.msk [vmem:[#allocation2 + $0x48] sm:$0xff] %vm287, -1e+30
          %298 = vst.msk [vmem:[#allocation2 + $0x50] sm:$0xff] %vm287, -1e+30
          %299 = vst.msk [vmem:[#allocation2 + $0x58] sm:$0xff] %vm287, -1e+30
          %300 = vst.msk [vmem:[#allocation2 + $0x60] sm:$0xff] %vm287, -1e+30
          %301 = vst.msk [vmem:[#allocation2 + $0x68] sm:$0xff] %vm287, -1e+30
          %302 = vst.msk [vmem:[#allocation2 + $0x70] sm:$0xff] %vm287, -1e+30
          %303 = vst.msk [vmem:[#allocation2 + $0x78] sm:$0xff] %vm287, -1e+30
          %304 = vst.msk [vmem:[#allocation3] sm:$0xff] %vm287, 0.0
          %305 = vst.msk [vmem:[#allocation3 + $0x8] sm:$0xff] %vm287, 0.0
          %306 = vst.msk [vmem:[#allocation3 + $0x10] sm:$0xff] %vm287, 0.0
          %307 = vst.msk [vmem:[#allocation3 + $0x18] sm:$0xff] %vm287, 0.0
          %308 = vst.msk [vmem:[#allocation3 + $0x20] sm:$0xff] %vm287, 0.0
          %309 = vst.msk [vmem:[#allocation3 + $0x28] sm:$0xff] %vm287, 0.0
          %310 = vst.msk [vmem:[#allocation3 + $0x30] sm:$0xff] %vm287, 0.0
          %311 = vst.msk [vmem:[#allocation3 + $0x38] sm:$0xff] %vm287, 0.0
          %312 = vst.msk [vmem:[#allocation3 + $0x40] sm:$0xff] %vm287, 0.0
          %313 = vst.msk [vmem:[#allocation3 + $0x48] sm:$0xff] %vm287, 0.0
          %314 = vst.msk [vmem:[#allocation3 + $0x50] sm:$0xff] %vm287, 0.0
          %315 = vst.msk [vmem:[#allocation3 + $0x58] sm:$0xff] %vm287, 0.0
          %316 = vst.msk [vmem:[#allocation3 + $0x60] sm:$0xff] %vm287, 0.0
          %317 = vst.msk [vmem:[#allocation3 + $0x68] sm:$0xff] %vm287, 0.0
          %318 = vst.msk [vmem:[#allocation3 + $0x70] sm:$0xff] %vm287, 0.0
          %319 = vst.msk [vmem:[#allocation3 + $0x78] sm:$0xff] %vm287, 0.0
        $region48: #{tpu_custom_call.1} parent=31 // pred_fallthru
          _
        %v320 = vld [vmem:[%s223] sm:$0xf]
        %v321 = vld [vmem:[%s223 + $0x4] sm:$0xf]
        %v322 = vld [vmem:[%s223 + $0x8] sm:$0xf]
        %v323 = vld [vmem:[%s223 + $0xc] sm:$0xf]
        %v324 = vld [vmem:[%s223 + $0x10] sm:$0xf]
        %v325 = vld [vmem:[%s223 + $0x14] sm:$0xf]
        %v326 = vld [vmem:[%s223 + $0x18] sm:$0xf]
        %v327 = vld [vmem:[%s223 + $0x1c] sm:$0xf]
        %v328 = vld [vmem:[%s223 + $0x20] sm:$0xf]
        %v329 = vld [vmem:[%s223 + $0x24] sm:$0xf]
        %v330 = vld [vmem:[%s223 + $0x28] sm:$0xf]
        %v331 = vld [vmem:[%s223 + $0x2c] sm:$0xf]
        %v332 = vld [vmem:[%s223 + $0x30] sm:$0xf]
        %v333 = vld [vmem:[%s223 + $0x34] sm:$0xf]
        %v334 = vld [vmem:[%s223 + $0x38] sm:$0xf]
        %v335 = vld [vmem:[%s223 + $0x3c] sm:$0xf]
        %v336 = vld [vmem:[%s232] sm:$0xf]
        %v337 = vld [vmem:[%s232 + $0x4] sm:$0xf]
        %v338 = vld [vmem:[%s232 + $0x8] sm:$0xf]
        %v339 = vld [vmem:[%s232 + $0xc] sm:$0xf]
        %v340 = vld [vmem:[%s232 + $0x10] sm:$0xf]
        %v341 = vld [vmem:[%s232 + $0x14] sm:$0xf]
        %v342 = vld [vmem:[%s232 + $0x18] sm:$0xf]
        %v343 = vld [vmem:[%s232 + $0x1c] sm:$0xf]
        %v344 = vld [vmem:[%s232 + $0x20] sm:$0xf]
        %v345 = vld [vmem:[%s232 + $0x24] sm:$0xf]
        %v346 = vld [vmem:[%s232 + $0x28] sm:$0xf]
        %v347 = vld [vmem:[%s232 + $0x2c] sm:$0xf]
        %v348 = vld [vmem:[%s232 + $0x30] sm:$0xf]
        %v349 = vld [vmem:[%s232 + $0x34] sm:$0xf]
        %v350 = vld [vmem:[%s232 + $0x38] sm:$0xf]
        %v351 = vld [vmem:[%s232 + $0x3c] sm:$0xf]
        %v368 = vunpack.c.l.b16 %v320
        %v369 = vunpack.c.l.b16 %v321
        %v370 = vunpack.c.l.b16 %v322
        %v371 = vunpack.c.l.b16 %v323
        %v372 = vunpack.c.l.b16 %v324
        %v373 = vunpack.c.l.b16 %v325
        %v374 = vunpack.c.l.b16 %v326
        %v375 = vunpack.c.l.b16 %v327
        %v376 = vunpack.c.l.b16 %v328
        %v377 = vunpack.c.l.b16 %v329
        %v378 = vunpack.c.l.b16 %v330
        %v379 = vunpack.c.l.b16 %v331
        %v380 = vunpack.c.l.b16 %v332
        %v381 = vunpack.c.l.b16 %v333
        %v382 = vunpack.c.l.b16 %v334
        %v383 = vunpack.c.l.b16 %v335
        %v384 = vpack.c.b16 %v369, %v368
        %v385 = vpack.c.b16 %v371, %v370
        %v386 = vpack.c.b16 %v373, %v372
        %v387 = vpack.c.b16 %v375, %v374
        %v388 = vpack.c.b16 %v377, %v376
        %v389 = vpack.c.b16 %v379, %v378
        %v390 = vpack.c.b16 %v381, %v380
        %v391 = vpack.c.b16 %v383, %v382
        %v416 = vunpack.c.l.b16 %v336
        %v417 = vunpack.c.l.b16 %v337
        %v418 = vunpack.c.l.b16 %v338
        %v419 = vunpack.c.l.b16 %v339
        %v420 = vunpack.c.l.b16 %v340
        %v421 = vunpack.c.l.b16 %v341
        %v422 = vunpack.c.l.b16 %v342
        %v423 = vunpack.c.l.b16 %v343
        %v424 = vunpack.c.l.b16 %v344
        %v425 = vunpack.c.l.b16 %v345
        %v426 = vunpack.c.l.b16 %v346
        %v427 = vunpack.c.l.b16 %v347
        %v428 = vunpack.c.l.b16 %v348
        %v429 = vunpack.c.l.b16 %v349
        %v430 = vunpack.c.l.b16 %v350
        %v431 = vunpack.c.l.b16 %v351
        %v432 = vpack.c.b16 %v417, %v416
        %v433 = vpack.c.b16 %v419, %v418
        %v434 = vpack.c.b16 %v421, %v420
        %v435 = vpack.c.b16 %v423, %v422
        %v436 = vpack.c.b16 %v425, %v424
        %v437 = vpack.c.b16 %v427, %v426
        %v438 = vpack.c.b16 %v429, %v428
        %v439 = vpack.c.b16 %v431, %v430
        %448 = vmatprep.subr.bf16.mxu0 0
        %449 = vmatpush1.bf16.msra.mxu0 %v432
        %450 = vmatprep.subr.bf16.mxu0 0
        %451 = vmatpush1.bf16.msra.mxu0 %v433
        %452 = vmatprep.subr.bf16.mxu0 0
        %453 = vmatpush1.bf16.msra.mxu0 %v434
        %454 = vmatprep.subr.bf16.mxu0 0
        %455 = vmatpush1.bf16.msra.mxu0 %v435
        %456 = vmatprep.subr.bf16.mxu0 0
        %457 = vmatpush1.bf16.msra.mxu0 %v436
        %458 = vmatprep.subr.bf16.mxu0 0
        %459 = vmatpush1.bf16.msra.mxu0 %v437
        %460 = vmatprep.subr.bf16.mxu0 0
        %461 = vmatpush1.bf16.msra.mxu0 %v438
        %462 = vmatprep.subr.bf16.mxu0 0
        %463 = vmatpush1.bf16.msra.mxu0 %v439
        %464 = vmatprep.subr.bf16.mxu0 0
        %465 = vmatpush1.bf16.msra.mxu0 0
        %466 = vmatprep.subr.bf16.mxu0 0
        %467 = vmatpush1.bf16.msra.mxu0 0
        %468 = vmatprep.subr.bf16.mxu0 0
        %469 = vmatpush1.bf16.msra.mxu0 0
        %470 = vmatprep.subr.bf16.mxu0 0
        %471 = vmatpush1.bf16.msra.mxu0 0
        %472 = vmatprep.subr.bf16.mxu0 0
        %473 = vmatpush1.bf16.msra.mxu0 0
        %474 = vmatprep.subr.bf16.mxu0 0
        %475 = vmatpush1.bf16.msra.mxu0 0
        %476 = vmatprep.subr.bf16.mxu0 0
        %477 = vmatpush1.bf16.msra.mxu0 0
        %478 = vmatprep.subr.bf16.mxu0 0
        %479 = vmatpush1.bf16.msra.mxu0 0
        %480 = vmatprep.mubr.bf16.mxu0 0
        %481 = vmatmul.mubr.bf16.gmra.mrb[0].mxu0 %v384
        %v482 = vpop.f32.mrb[0].mxu0
        %v483 = vadd.f32 0.0, %v482
        %v484 = vpop.f32.mrb[0].mxu0
        %v485 = vpop.f32.mrb[0].mxu0
        %v486 = vadd.f32 0.0, %v485
        %v487 = vpop.f32.mrb[0].mxu0
        %488 = vmatprep.mubr.bf16.mxu0 0
        %489 = vmatmul.mubr.bf16.gmra.mrb[0].mxu0 %v385
        %v490 = vpop.f32.mrb[0].mxu0
        %v491 = vadd.f32 0.0, %v490
        %v492 = vpop.f32.mrb[0].mxu0
        %v493 = vpop.f32.mrb[0].mxu0
        %v494 = vadd.f32 0.0, %v493
        %v495 = vpop.f32.mrb[0].mxu0
        %496 = vmatprep.mubr.bf16.mxu0 0
        %497 = vmatmul.mubr.bf16.gmra.mrb[0].mxu0 %v386
        %v498 = vpop.f32.mrb[0].mxu0
        %v499 = vadd.f32 0.0, %v498
        %v500 = vpop.f32.mrb[0].mxu0
        %v501 = vpop.f32.mrb[0].mxu0
        %v502 = vadd.f32 0.0, %v501
        %v503 = vpop.f32.mrb[0].mxu0
        %504 = vmatprep.mubr.bf16.mxu0 0
        %505 = vmatmul.mubr.bf16.gmra.mrb[0].mxu0 %v387
        %v506 = vpop.f32.mrb[0].mxu0
        %v507 = vadd.f32 0.0, %v506
        %v508 = vpop.f32.mrb[0].mxu0
        %v509 = vpop.f32.mrb[0].mxu0
        %v510 = vadd.f32 0.0, %v509
        %v511 = vpop.f32.mrb[0].mxu0
        %512 = vmatprep.mubr.bf16.mxu0 0
        %513 = vmatmul.mubr.bf16.gmra.mrb[0].mxu0 %v388
        %v514 = vpop.f32.mrb[0].mxu0
        %v515 = vadd.f32 0.0, %v514
        %v516 = vpop.f32.mrb[0].mxu0
        %v517 = vpop.f32.mrb[0].mxu0
        %v518 = vadd.f32 0.0, %v517
        %v519 = vpop.f32.mrb[0].mxu0
        %520 = vmatprep.mubr.bf16.mxu0 0
        %521 = vmatmul.mubr.bf16.gmra.mrb[0].mxu0 %v389
        %v522 = vpop.f32.mrb[0].mxu0
        %v523 = vadd.f32 0.0, %v522
        %v524 = vpop.f32.mrb[0].mxu0
        %v525 = vpop.f32.mrb[0].mxu0
        %v526 = vadd.f32 0.0, %v525
        %v527 = vpop.f32.mrb[0].mxu0
        %528 = vmatprep.mubr.bf16.mxu0 0
        %529 = vmatmul.mubr.bf16.gmra.mrb[0].mxu0 %v390
        %v530 = vpop.f32.mrb[0].mxu0
        %v531 = vadd.f32 0.0, %v530
        %v532 = vpop.f32.mrb[0].mxu0
        %v533 = vpop.f32.mrb[0].mxu0
        %v534 = vadd.f32 0.0, %v533
        %v535 = vpop.f32.mrb[0].mxu0
        %536 = vmatprep.mubr.bf16.mxu0 0
        %537 = vmatmul.mubr.bf16.gmra.mrb[0].mxu0 %v391
        %v538 = vpop.f32.mrb[0].mxu0
        %v539 = vadd.f32 0.0, %v538
        %v540 = vpop.f32.mrb[0].mxu0
        %v541 = vpop.f32.mrb[0].mxu0
        %v542 = vadd.f32 0.0, %v541
        %v543 = vpop.f32.mrb[0].mxu0
        %544 = vdwg.mxu0
        %v545 = vmul.f32 %v483, 2.0
        %v546 = vmul.f32 %v486, 2.0
        %v547 = vmul.f32 %v491, 2.0
        %v548 = vmul.f32 %v494, 2.0
        %v549 = vmul.f32 %v499, 2.0
        %v550 = vmul.f32 %v502, 2.0
        %v551 = vmul.f32 %v507, 2.0
        %v552 = vmul.f32 %v510, 2.0
        %v553 = vmul.f32 %v515, 2.0
        %v554 = vmul.f32 %v518, 2.0
        %v555 = vmul.f32 %v523, 2.0
        %v556 = vmul.f32 %v526, 2.0
        %v557 = vmul.f32 %v531, 2.0
        %v558 = vmul.f32 %v534, 2.0
        %v559 = vmul.f32 %v539, 2.0
        %v560 = vmul.f32 %v542, 2.0
        %s561 = smul.u32 %s25, 128
        %v562 = vlaneseq
        %v563 = vand.u32 %v562, 127
        %s564 = smul.u32 %s24, 128
        %v565 = vlaneseq
        %v566 = vshrl.u32 %v565, 7
        %v567 = vadd.s32 %v566, 8
        %v568 = vadd.s32 %v566, 16
        %v569 = vadd.s32 %v566, 24
        %v570 = vadd.s32 %v566, 32
        %v571 = vadd.s32 %v566, 40
        %v572 = vadd.s32 %v566, 48
        %v573 = vadd.s32 %v566, 56
        %v574 = vadd.s32 %v566, 64
        %v575 = vadd.s32 %v566, 72
        %v576 = vadd.s32 %v566, 80
        %v577 = vadd.s32 %v566, 88
        %v578 = vadd.s32 %v566, 96
        %v579 = vadd.s32 %v566, 104
        %v580 = vadd.s32 %v566, 112
        %v581 = vadd.s32 %v566, 120
        %v582 = vstv %s564
        %v583 = vadd.s32 %v582, %v566
        %v584 = vadd.s32 %v582, %v567
        %v585 = vadd.s32 %v582, %v568
        %v586 = vadd.s32 %v582, %v569
        %v587 = vadd.s32 %v582, %v570
        %v588 = vadd.s32 %v582, %v571
        %v589 = vadd.s32 %v582, %v572
        %v590 = vadd.s32 %v582, %v573
        %v591 = vadd.s32 %v582, %v574
        %v592 = vadd.s32 %v582, %v575
        %v593 = vadd.s32 %v582, %v576
        %v594 = vadd.s32 %v582, %v577
        %v595 = vadd.s32 %v582, %v578
        %v596 = vadd.s32 %v582, %v579
        %v597 = vadd.s32 %v582, %v580
        %v598 = vadd.s32 %v582, %v581
        %v599 = vstv %s561
        %v600 = vsub.s32 %v583, %v599
        %v601 = vsub.s32 %v584, %v599
        %v602 = vsub.s32 %v585, %v599
        %v603 = vsub.s32 %v586, %v599
        %v604 = vsub.s32 %v587, %v599
        %v605 = vsub.s32 %v588, %v599
        %v606 = vsub.s32 %v589, %v599
        %v607 = vsub.s32 %v590, %v599
        %v608 = vsub.s32 %v591, %v599
        %v609 = vsub.s32 %v592, %v599
        %v610 = vsub.s32 %v593, %v599
        %v611 = vsub.s32 %v594, %v599
        %v612 = vsub.s32 %v595, %v599
        %v613 = vsub.s32 %v596, %v599
        %v614 = vsub.s32 %v597, %v599
        %v615 = vsub.s32 %v598, %v599
        %vm616 = vcmp.eq.s32.totalorder %v563, %v600
        %vm617 = vcmp.eq.s32.totalorder %v563, %v601
        %vm618 = vcmp.eq.s32.totalorder %v563, %v602
        %vm619 = vcmp.eq.s32.totalorder %v563, %v603
        %vm620 = vcmp.eq.s32.totalorder %v563, %v604
        %vm621 = vcmp.eq.s32.totalorder %v563, %v605
        %vm622 = vcmp.eq.s32.totalorder %v563, %v606
        %vm623 = vcmp.eq.s32.totalorder %v563, %v607
        %vm624 = vcmp.eq.s32.totalorder %v563, %v608
        %vm625 = vcmp.eq.s32.totalorder %v563, %v609
        %vm626 = vcmp.eq.s32.totalorder %v563, %v610
        %vm627 = vcmp.eq.s32.totalorder %v563, %v611
        %vm628 = vcmp.eq.s32.totalorder %v563, %v612
        %vm629 = vcmp.eq.s32.totalorder %v563, %v613
        %vm630 = vcmp.eq.s32.totalorder %v563, %v614
        %vm631 = vcmp.eq.s32.totalorder %v563, %v615
        %s632 = ssub.s32 192, %s561
        %v633 = vstv %s632
        %vm634 = vcmp.ge.s32.totalorder %v563, %v633
        %vm635 = vmor %vm616, %vm634
        %vm636 = vmor %vm617, %vm634
        %vm637 = vmor %vm618, %vm634
        %vm638 = vmor %vm619, %vm634
        %vm639 = vmor %vm620, %vm634
        %vm640 = vmor %vm621, %vm634
        %vm641 = vmor %vm622, %vm634
        %vm642 = vmor %vm623, %vm634
        %vm643 = vmor %vm624, %vm634
        %vm644 = vmor %vm625, %vm634
        %vm645 = vmor %vm626, %vm634
        %vm646 = vmor %vm627, %vm634
        %vm647 = vmor %vm628, %vm634
        %vm648 = vmor %vm629, %vm634
        %vm649 = vmor %vm630, %vm634
        %vm650 = vmor %vm631, %vm634
        %v651 = vsel %vm635, -1e+30, %v545
        %v652 = vsel %vm636, -1e+30, %v546
        %v653 = vsel %vm637, -1e+30, %v547
        %v654 = vsel %vm638, -1e+30, %v548
        %v655 = vsel %vm639, -1e+30, %v549
        %v656 = vsel %vm640, -1e+30, %v550
        %v657 = vsel %vm641, -1e+30, %v551
        %v658 = vsel %vm642, -1e+30, %v552
        %v659 = vsel %vm643, -1e+30, %v553
        %v660 = vsel %vm644, -1e+30, %v554
        %v661 = vsel %vm645, -1e+30, %v555
        %v662 = vsel %vm646, -1e+30, %v556
        %v663 = vsel %vm647, -1e+30, %v557
        %v664 = vsel %vm648, -1e+30, %v558
        %v665 = vsel %vm649, -1e+30, %v559
        %v666 = vsel %vm650, -1e+30, %v560
        %v667 = vld [vmem:[#allocation2] sm:$0xff]
        %v668 = vld [vmem:[#allocation2 + $0x8] sm:$0xff]
        %v669 = vld [vmem:[#allocation2 + $0x10] sm:$0xff]
        %v670 = vld [vmem:[#allocation2 + $0x18] sm:$0xff]
        %v671 = vld [vmem:[#allocation2 + $0x20] sm:$0xff]
        %v672 = vld [vmem:[#allocation2 + $0x28] sm:$0xff]
        %v673 = vld [vmem:[#allocation2 + $0x30] sm:$0xff]
        %v674 = vld [vmem:[#allocation2 + $0x38] sm:$0xff]
        %v675 = vld [vmem:[#allocation2 + $0x40] sm:$0xff]
        %v676 = vld [vmem:[#allocation2 + $0x48] sm:$0xff]
        %v677 = vld [vmem:[#allocation2 + $0x50] sm:$0xff]
        %v678 = vld [vmem:[#allocation2 + $0x58] sm:$0xff]
        %v679 = vld [vmem:[#allocation2 + $0x60] sm:$0xff]
        %v680 = vld [vmem:[#allocation2 + $0x68] sm:$0xff]
        %v681 = vld [vmem:[#allocation2 + $0x70] sm:$0xff]
        %v682 = vld [vmem:[#allocation2 + $0x78] sm:$0xff]
        %683 = vmax.xlane.f32.xlu0 %v651
        %v684 = vpop.xlane.xlu0 %683
        %685 = vmax.xlane.f32.xlu0 %v652
        %v686 = vpop.xlane.xlu0 %685
        %687 = vmax.xlane.f32.xlu0 %v653
        %v688 = vpop.xlane.xlu0 %687
        %689 = vmax.xlane.f32.xlu0 %v654
        %v690 = vpop.xlane.xlu0 %689
        %691 = vmax.xlane.f32.xlu0 %v655
        %v692 = vpop.xlane.xlu0 %691
        %693 = vmax.xlane.f32.xlu0 %v656
        %v694 = vpop.xlane.xlu0 %693
        %695 = vmax.xlane.f32.xlu0 %v657
        %v696 = vpop.xlane.xlu0 %695
        %697 = vmax.xlane.f32.xlu0 %v658
        %v698 = vpop.xlane.xlu0 %697
        %699 = vmax.xlane.f32.xlu0 %v659
        %v700 = vpop.xlane.xlu0 %699
        %701 = vmax.xlane.f32.xlu0 %v660
        %v702 = vpop.xlane.xlu0 %701
        %703 = vmax.xlane.f32.xlu0 %v661
        %v704 = vpop.xlane.xlu0 %703
        %705 = vmax.xlane.f32.xlu0 %v662
        %v706 = vpop.xlane.xlu0 %705
        %707 = vmax.xlane.f32.xlu0 %v663
        %v708 = vpop.xlane.xlu0 %707
        %709 = vmax.xlane.f32.xlu0 %v664
        %v710 = vpop.xlane.xlu0 %709
        %711 = vmax.xlane.f32.xlu0 %v665
        %v712 = vpop.xlane.xlu0 %711
        %713 = vmax.xlane.f32.xlu0 %v666
        %v714 = vpop.xlane.xlu0 %713
        %v715 = vmax.f32 %v667, %v684
        %v716 = vmax.f32 %v668, %v686
        %v717 = vmax.f32 %v669, %v688
        %v718 = vmax.f32 %v670, %v690
        %v719 = vmax.f32 %v671, %v692
        %v720 = vmax.f32 %v672, %v694
        %v721 = vmax.f32 %v673, %v696
        %v722 = vmax.f32 %v674, %v698
        %v723 = vmax.f32 %v675, %v700
        %v724 = vmax.f32 %v676, %v702
        %v725 = vmax.f32 %v677, %v704
        %v726 = vmax.f32 %v678, %v706
        %v727 = vmax.f32 %v679, %v708
        %v728 = vmax.f32 %v680, %v710
        %v729 = vmax.f32 %v681, %v712
        %v730 = vmax.f32 %v682, %v714
        %v731 = vsub.f32 %v667, %v715
        %v732 = vsub.f32 %v668, %v716
        %v733 = vsub.f32 %v669, %v717
        %v734 = vsub.f32 %v670, %v718
        %v735 = vsub.f32 %v671, %v719
        %v736 = vsub.f32 %v672, %v720
        %v737 = vsub.f32 %v673, %v721
        %v738 = vsub.f32 %v674, %v722
        %v739 = vsub.f32 %v675, %v723
        %v740 = vsub.f32 %v676, %v724
        %v741 = vsub.f32 %v677, %v725
        %v742 = vsub.f32 %v678, %v726
        %v743 = vsub.f32 %v679, %v727
        %v744 = vsub.f32 %v680, %v728
        %v745 = vsub.f32 %v681, %v729
        %v746 = vsub.f32 %v682, %v730
        %v747 = vmul.f32 %v731, 1.442695
        %v748 = vpow.pop %v747
        %v749 = vmul.f32 %v732, 1.442695
        %v750 = vpow.pop %v749
        %v751 = vmul.f32 %v733, 1.442695
        %v752 = vpow.pop %v751
        %v753 = vmul.f32 %v734, 1.442695
        %v754 = vpow.pop %v753
        %v755 = vmul.f32 %v735, 1.442695
        %v756 = vpow.pop %v755
        %v757 = vmul.f32 %v736, 1.442695
        %v758 = vpow.pop %v757
        %v759 = vmul.f32 %v737, 1.442695
        %v760 = vpow.pop %v759
        %v761 = vmul.f32 %v738, 1.442695
        %v762 = vpow.pop %v761
        %v763 = vmul.f32 %v739, 1.442695
        %v764 = vpow.pop %v763
        %v765 = vmul.f32 %v740, 1.442695
        %v766 = vpow.pop %v765
        %v767 = vmul.f32 %v741, 1.442695
        %v768 = vpow.pop %v767
        %v769 = vmul.f32 %v742, 1.442695
        %v770 = vpow.pop %v769
        %v771 = vmul.f32 %v743, 1.442695
        %v772 = vpow.pop %v771
        %v773 = vmul.f32 %v744, 1.442695
        %v774 = vpow.pop %v773
        %v775 = vmul.f32 %v745, 1.442695
        %v776 = vpow.pop %v775
        %v777 = vmul.f32 %v746, 1.442695
        %v778 = vpow.pop %v777
        %v779 = vld [vmem:[#allocation3] sm:$0xff]
        %v780 = vld [vmem:[#allocation3 + $0x8] sm:$0xff]
        %v781 = vld [vmem:[#allocation3 + $0x10] sm:$0xff]
        %v782 = vld [vmem:[#allocation3 + $0x18] sm:$0xff]
        %v783 = vld [vmem:[#allocation3 + $0x20] sm:$0xff]
        %v784 = vld [vmem:[#allocation3 + $0x28] sm:$0xff]
        %v785 = vld [vmem:[#allocation3 + $0x30] sm:$0xff]
        %v786 = vld [vmem:[#allocation3 + $0x38] sm:$0xff]
        %v787 = vld [vmem:[#allocation3 + $0x40] sm:$0xff]
        %v788 = vld [vmem:[#allocation3 + $0x48] sm:$0xff]
        %v789 = vld [vmem:[#allocation3 + $0x50] sm:$0xff]
        %v790 = vld [vmem:[#allocation3 + $0x58] sm:$0xff]
        %v791 = vld [vmem:[#allocation3 + $0x60] sm:$0xff]
        %v792 = vld [vmem:[#allocation3 + $0x68] sm:$0xff]
        %v793 = vld [vmem:[#allocation3 + $0x70] sm:$0xff]
        %v794 = vld [vmem:[#allocation3 + $0x78] sm:$0xff]
        %v795 = vmul.f32 %v748, %v779
        %v796 = vmul.f32 %v750, %v780
        %v797 = vmul.f32 %v752, %v781
        %v798 = vmul.f32 %v754, %v782
        %v799 = vmul.f32 %v756, %v783
        %v800 = vmul.f32 %v758, %v784
        %v801 = vmul.f32 %v760, %v785
        %v802 = vmul.f32 %v762, %v786
        %v803 = vmul.f32 %v764, %v787
        %v804 = vmul.f32 %v766, %v788
        %v805 = vmul.f32 %v768, %v789
        %v806 = vmul.f32 %v770, %v790
        %v807 = vmul.f32 %v772, %v791
        %v808 = vmul.f32 %v774, %v792
        %v809 = vmul.f32 %v776, %v793
        %v810 = vmul.f32 %v778, %v794
        %812 = vset.pattern.permute.xlu0 0
        %813 = vperm.xlu0 %812, %v715
        %v814 = vpop.permute.xlu0 %813
        %817 = vset.pattern.permute.xlu0 0
        %818 = vperm.xlu0 %817, %v716
        %v819 = vpop.permute.xlu0 %818
        %822 = vset.pattern.permute.xlu0 0
        %823 = vperm.xlu0 %822, %v717
        %v824 = vpop.permute.xlu0 %823
        %827 = vset.pattern.permute.xlu0 0
        %828 = vperm.xlu0 %827, %v718
        %v829 = vpop.permute.xlu0 %828
        %832 = vset.pattern.permute.xlu0 0
        %833 = vperm.xlu0 %832, %v719
        %v834 = vpop.permute.xlu0 %833
        %837 = vset.pattern.permute.xlu0 0
        %838 = vperm.xlu0 %837, %v720
        %v839 = vpop.permute.xlu0 %838
        %842 = vset.pattern.permute.xlu0 0
        %843 = vperm.xlu0 %842, %v721
        %v844 = vpop.permute.xlu0 %843
        %847 = vset.pattern.permute.xlu0 0
        %848 = vperm.xlu0 %847, %v722
        %v849 = vpop.permute.xlu0 %848
        %852 = vset.pattern.permute.xlu0 0
        %853 = vperm.xlu0 %852, %v723
        %v854 = vpop.permute.xlu0 %853
        %857 = vset.pattern.permute.xlu0 0
        %858 = vperm.xlu0 %857, %v724
        %v859 = vpop.permute.xlu0 %858
        %862 = vset.pattern.permute.xlu0 0
        %863 = vperm.xlu0 %862, %v725
        %v864 = vpop.permute.xlu0 %863
        %867 = vset.pattern.permute.xlu0 0
        %868 = vperm.xlu0 %867, %v726
        %v869 = vpop.permute.xlu0 %868
        %872 = vset.pattern.permute.xlu0 0
        %873 = vperm.xlu0 %872, %v727
        %v874 = vpop.permute.xlu0 %873
        %877 = vset.pattern.permute.xlu0 0
        %878 = vperm.xlu0 %877, %v728
        %v879 = vpop.permute.xlu0 %878
        %882 = vset.pattern.permute.xlu0 0
        %883 = vperm.xlu0 %882, %v729
        %v884 = vpop.permute.xlu0 %883
        %887 = vset.pattern.permute.xlu0 0
        %888 = vperm.xlu0 %887, %v730
        %v889 = vpop.permute.xlu0 %888
        %v891 = vsub.f32 %v651, %v814
        %v892 = vsub.f32 %v652, %v819
        %v893 = vsub.f32 %v653, %v824
        %v894 = vsub.f32 %v654, %v829
        %v895 = vsub.f32 %v655, %v834
        %v896 = vsub.f32 %v656, %v839
        %v897 = vsub.f32 %v657, %v844
        %v898 = vsub.f32 %v658, %v849
        %v899 = vsub.f32 %v659, %v854
        %v900 = vsub.f32 %v660, %v859
        %v901 = vsub.f32 %v661, %v864
        %v902 = vsub.f32 %v662, %v869
        %v903 = vsub.f32 %v663, %v874
        %v904 = vsub.f32 %v664, %v879
        %v905 = vsub.f32 %v665, %v884
        %v906 = vsub.f32 %v666, %v889
        %v907 = vmul.f32 %v891, 1.442695
        %v908 = vpow.pop %v907
        %v909 = vmul.f32 %v892, 1.442695
        %v910 = vpow.pop %v909
        %v911 = vmul.f32 %v893, 1.442695
        %v912 = vpow.pop %v911
        %v913 = vmul.f32 %v894, 1.442695
        %v914 = vpow.pop %v913
        %v915 = vmul.f32 %v895, 1.442695
        %v916 = vpow.pop %v915
        %v917 = vmul.f32 %v896, 1.442695
        %v918 = vpow.pop %v917
        %v919 = vmul.f32 %v897, 1.442695
        %v920 = vpow.pop %v919
        %v921 = vmul.f32 %v898, 1.442695
        %v922 = vpow.pop %v921
        %v923 = vmul.f32 %v899, 1.442695
        %v924 = vpow.pop %v923
        %v925 = vmul.f32 %v900, 1.442695
        %v926 = vpow.pop %v925
        %v927 = vmul.f32 %v901, 1.442695
        %v928 = vpow.pop %v927
        %v929 = vmul.f32 %v902, 1.442695
        %v930 = vpow.pop %v929
        %v931 = vmul.f32 %v903, 1.442695
        %v932 = vpow.pop %v931
        %v933 = vmul.f32 %v904, 1.442695
        %v934 = vpow.pop %v933
        %v935 = vmul.f32 %v905, 1.442695
        %v936 = vpow.pop %v935
        %v937 = vmul.f32 %v906, 1.442695
        %v938 = vpow.pop %v937
        %939 = vadd.xlane.f32.xlu0 %v908
        %v940 = vpop.xlane.xlu0 %939
        %941 = vadd.xlane.f32.xlu0 %v910
        %v942 = vpop.xlane.xlu0 %941
        %943 = vadd.xlane.f32.xlu0 %v912
        %v944 = vpop.xlane.xlu0 %943
        %945 = vadd.xlane.f32.xlu0 %v914
        %v946 = vpop.xlane.xlu0 %945
        %947 = vadd.xlane.f32.xlu0 %v916
        %v948 = vpop.xlane.xlu0 %947
        %949 = vadd.xlane.f32.xlu0 %v918
        %v950 = vpop.xlane.xlu0 %949
        %951 = vadd.xlane.f32.xlu0 %v920
        %v952 = vpop.xlane.xlu0 %951
        %953 = vadd.xlane.f32.xlu0 %v922
        %v954 = vpop.xlane.xlu0 %953
        %955 = vadd.xlane.f32.xlu0 %v924
        %v956 = vpop.xlane.xlu0 %955
        %957 = vadd.xlane.f32.xlu0 %v926
        %v958 = vpop.xlane.xlu0 %957
        %959 = vadd.xlane.f32.xlu0 %v928
        %v960 = vpop.xlane.xlu0 %959
        %961 = vadd.xlane.f32.xlu0 %v930
        %v962 = vpop.xlane.xlu0 %961
        %963 = vadd.xlane.f32.xlu0 %v932
        %v964 = vpop.xlane.xlu0 %963
        %965 = vadd.xlane.f32.xlu0 %v934
        %v966 = vpop.xlane.xlu0 %965
        %967 = vadd.xlane.f32.xlu0 %v936
        %v968 = vpop.xlane.xlu0 %967
        %969 = vadd.xlane.f32.xlu0 %v938
        %v970 = vpop.xlane.xlu0 %969
        %v971 = vadd.f32 %v795, %v940
        %v972 = vadd.f32 %v796, %v942
        %v973 = vadd.f32 %v797, %v944
        %v974 = vadd.f32 %v798, %v946
        %v975 = vadd.f32 %v799, %v948
        %v976 = vadd.f32 %v800, %v950
        %v977 = vadd.f32 %v801, %v952
        %v978 = vadd.f32 %v802, %v954
        %v979 = vadd.f32 %v803, %v956
        %v980 = vadd.f32 %v804, %v958
        %v981 = vadd.f32 %v805, %v960
        %v982 = vadd.f32 %v806, %v962
        %v983 = vadd.f32 %v807, %v964
        %v984 = vadd.f32 %v808, %v966
        %v985 = vadd.f32 %v809, %v968
        %v986 = vadd.f32 %v810, %v970
        %vm987 = vcmask 7168
        %988 = vst.msk [vmem:[#allocation3] sm:$0xff] %vm987, %v971
        %989 = vst.msk [vmem:[#allocation3 + $0x8] sm:$0xff] %vm987, %v972
        %990 = vst.msk [vmem:[#allocation3 + $0x10] sm:$0xff] %vm987, %v973
        %991 = vst.msk [vmem:[#allocation3 + $0x18] sm:$0xff] %vm987, %v974
        %992 = vst.msk [vmem:[#allocation3 + $0x20] sm:$0xff] %vm987, %v975
        %993 = vst.msk [vmem:[#allocation3 + $0x28] sm:$0xff] %vm987, %v976
        %994 = vst.msk [vmem:[#allocation3 + $0x30] sm:$0xff] %vm987, %v977
        %995 = vst.msk [vmem:[#allocation3 + $0x38] sm:$0xff] %vm987, %v978
        %996 = vst.msk [vmem:[#allocation3 + $0x40] sm:$0xff] %vm987, %v979
        %997 = vst.msk [vmem:[#allocation3 + $0x48] sm:$0xff] %vm987, %v980
        %998 = vst.msk [vmem:[#allocation3 + $0x50] sm:$0xff] %vm987, %v981
        %999 = vst.msk [vmem:[#allocation3 + $0x58] sm:$0xff] %vm987, %v982
        %1000 = vst.msk [vmem:[#allocation3 + $0x60] sm:$0xff] %vm987, %v983
        %1001 = vst.msk [vmem:[#allocation3 + $0x68] sm:$0xff] %vm987, %v984
        %1002 = vst.msk [vmem:[#allocation3 + $0x70] sm:$0xff] %vm987, %v985
        %1003 = vst.msk [vmem:[#allocation3 + $0x78] sm:$0xff] %vm987, %v986
        %1004 = vst.msk [vmem:[#allocation2] sm:$0xff] %vm987, %v715
        %1005 = vst.msk [vmem:[#allocation2 + $0x8] sm:$0xff] %vm987, %v716
        %1006 = vst.msk [vmem:[#allocation2 + $0x10] sm:$0xff] %vm987, %v717
        %1007 = vst.msk [vmem:[#allocation2 + $0x18] sm:$0xff] %vm987, %v718
        %1008 = vst.msk [vmem:[#allocation2 + $0x20] sm:$0xff] %vm987, %v719
        %1009 = vst.msk [vmem:[#allocation2 + $0x28] sm:$0xff] %vm987, %v720
        %1010 = vst.msk [vmem:[#allocation2 + $0x30] sm:$0xff] %vm987, %v721
        %1011 = vst.msk [vmem:[#allocation2 + $0x38] sm:$0xff] %vm987, %v722
        %1012 = vst.msk [vmem:[#allocation2 + $0x40] sm:$0xff] %vm987, %v723
        %1013 = vst.msk [vmem:[#allocation2 + $0x48] sm:$0xff] %vm987, %v724
        %1014 = vst.msk [vmem:[#allocation2 + $0x50] sm:$0xff] %vm987, %v725
        %1015 = vst.msk [vmem:[#allocation2 + $0x58] sm:$0xff] %vm987, %v726
        %1016 = vst.msk [vmem:[#allocation2 + $0x60] sm:$0xff] %vm987, %v727
        %1017 = vst.msk [vmem:[#allocation2 + $0x68] sm:$0xff] %vm987, %v728
        %1018 = vst.msk [vmem:[#allocation2 + $0x70] sm:$0xff] %vm987, %v729
        %1019 = vst.msk [vmem:[#allocation2 + $0x78] sm:$0xff] %vm987, %v730
        %p1020 = scmp.eq.s32.totalorder %s25, 1
        // Predicated region
        $region49: #{tpu_custom_call.1} parent=31 // pred_check
          %p1021 = pneg %p1020
        $region50: #{tpu_custom_call.1} parent=31 // pred_check_branch
          %1023 = sbr.rel (%p1021) target = $region52
        $region51: #{tpu_custom_call.1} parent=31 // pred_region
          %v1024 = vld [vmem:[%s223] sm:$0xf]
          %v1025 = vld [vmem:[%s223 + $0x4] sm:$0xf]
          %v1026 = vld [vmem:[%s223 + $0x8] sm:$0xf]
          %v1027 = vld [vmem:[%s223 + $0xc] sm:$0xf]
          %v1028 = vld [vmem:[%s223 + $0x10] sm:$0xf]
          %v1029 = vld [vmem:[%s223 + $0x14] sm:$0xf]
          %v1030 = vld [vmem:[%s223 + $0x18] sm:$0xf]
          %v1031 = vld [vmem:[%s223 + $0x1c] sm:$0xf]
          %v1032 = vld [vmem:[%s223 + $0x20] sm:$0xf]
          %v1033 = vld [vmem:[%s223 + $0x24] sm:$0xf]
          %v1034 = vld [vmem:[%s223 + $0x28] sm:$0xf]
          %v1035 = vld [vmem:[%s223 + $0x2c] sm:$0xf]
          %v1036 = vld [vmem:[%s223 + $0x30] sm:$0xf]
          %v1037 = vld [vmem:[%s223 + $0x34] sm:$0xf]
          %v1038 = vld [vmem:[%s223 + $0x38] sm:$0xf]
          %v1039 = vld [vmem:[%s223 + $0x3c] sm:$0xf]
          %v1040 = vunpack.c.l.bf16 %v1024
          %v1041 = vunpack.c.l.bf16 %v1025
          %v1042 = vunpack.c.l.bf16 %v1026
          %v1043 = vunpack.c.l.bf16 %v1027
          %v1044 = vunpack.c.l.bf16 %v1028
          %v1045 = vunpack.c.l.bf16 %v1029
          %v1046 = vunpack.c.l.bf16 %v1030
          %v1047 = vunpack.c.l.bf16 %v1031
          %v1048 = vunpack.c.l.bf16 %v1032
          %v1049 = vunpack.c.l.bf16 %v1033
          %v1050 = vunpack.c.l.bf16 %v1034
          %v1051 = vunpack.c.l.bf16 %v1035
          %v1052 = vunpack.c.l.bf16 %v1036
          %v1053 = vunpack.c.l.bf16 %v1037
          %v1054 = vunpack.c.l.bf16 %v1038
          %v1055 = vunpack.c.l.bf16 %v1039
          %v1056 = vld [vmem:[%s241] sm:$0xf]
          %v1057 = vld [vmem:[%s241 + $0x4] sm:$0xf]
          %v1058 = vld [vmem:[%s241 + $0x8] sm:$0xf]
          %v1059 = vld [vmem:[%s241 + $0xc] sm:$0xf]
          %v1060 = vld [vmem:[%s241 + $0x10] sm:$0xf]
          %v1061 = vld [vmem:[%s241 + $0x14] sm:$0xf]
          %v1062 = vld [vmem:[%s241 + $0x18] sm:$0xf]
          %v1063 = vld [vmem:[%s241 + $0x1c] sm:$0xf]
          %v1064 = vld [vmem:[%s241 + $0x20] sm:$0xf]
          %v1065 = vld [vmem:[%s241 + $0x24] sm:$0xf]
          %v1066 = vld [vmem:[%s241 + $0x28] sm:$0xf]
          %v1067 = vld [vmem:[%s241 + $0x2c] sm:$0xf]
          %v1068 = vld [vmem:[%s241 + $0x30] sm:$0xf]
          %v1069 = vld [vmem:[%s241 + $0x34] sm:$0xf]
          %v1070 = vld [vmem:[%s241 + $0x38] sm:$0xf]
          %v1071 = vld [vmem:[%s241 + $0x3c] sm:$0xf]
          %v1072 = vunpack.c.l.bf16 %v1056
          %v1073 = vunpack.c.l.bf16 %v1057
          %v1074 = vunpack.c.l.bf16 %v1058
          %v1075 = vunpack.c.l.bf16 %v1059
          %v1076 = vunpack.c.l.bf16 %v1060
          %v1077 = vunpack.c.l.bf16 %v1061
          %v1078 = vunpack.c.l.bf16 %v1062
          %v1079 = vunpack.c.l.bf16 %v1063
          %v1080 = vunpack.c.l.bf16 %v1064
          %v1081 = vunpack.c.l.bf16 %v1065
          %v1082 = vunpack.c.l.bf16 %v1066
          %v1083 = vunpack.c.l.bf16 %v1067
          %v1084 = vunpack.c.l.bf16 %v1068
          %v1085 = vunpack.c.l.bf16 %v1069
          %v1086 = vunpack.c.l.bf16 %v1070
          %v1087 = vunpack.c.l.bf16 %v1071
          %v1088 = vmul.f32 %v1040, %v1072
          %v1089 = vmul.f32 %v1041, %v1073
          %v1090 = vmul.f32 %v1042, %v1074
          %v1091 = vmul.f32 %v1043, %v1075
          %v1092 = vmul.f32 %v1044, %v1076
          %v1093 = vmul.f32 %v1045, %v1077
          %v1094 = vmul.f32 %v1046, %v1078
          %v1095 = vmul.f32 %v1047, %v1079
          %v1096 = vmul.f32 %v1048, %v1080
          %v1097 = vmul.f32 %v1049, %v1081
          %v1098 = vmul.f32 %v1050, %v1082
          %v1099 = vmul.f32 %v1051, %v1083
          %v1100 = vmul.f32 %v1052, %v1084
          %v1101 = vmul.f32 %v1053, %v1085
          %v1102 = vmul.f32 %v1054, %v1086
          %v1103 = vmul.f32 %v1055, %v1087
          %1104 = vadd.xlane.f32.xlu0 %v1088
          %v1105 = vpop.xlane.xlu0 %1104
          %1106 = vadd.xlane.f32.xlu0 %v1089
          %v1107 = vpop.xlane.xlu0 %1106
          %1108 = vadd.xlane.f32.xlu0 %v1090
          %v1109 = vpop.xlane.xlu0 %1108
          %1110 = vadd.xlane.f32.xlu0 %v1091
          %v1111 = vpop.xlane.xlu0 %1110
          %1112 = vadd.xlane.f32.xlu0 %v1092
          %v1113 = vpop.xlane.xlu0 %1112
          %1114 = vadd.xlane.f32.xlu0 %v1093
          %v1115 = vpop.xlane.xlu0 %1114
          %1116 = vadd.xlane.f32.xlu0 %v1094
          %v1117 = vpop.xlane.xlu0 %1116
          %1118 = vadd.xlane.f32.xlu0 %v1095
          %v1119 = vpop.xlane.xlu0 %1118
          %1120 = vadd.xlane.f32.xlu0 %v1096
          %v1121 = vpop.xlane.xlu0 %1120
          %1122 = vadd.xlane.f32.xlu0 %v1097
          %v1123 = vpop.xlane.xlu0 %1122
          %1124 = vadd.xlane.f32.xlu0 %v1098
          %v1125 = vpop.xlane.xlu0 %1124
          %1126 = vadd.xlane.f32.xlu0 %v1099
          %v1127 = vpop.xlane.xlu0 %1126
          %1128 = vadd.xlane.f32.xlu0 %v1100
          %v1129 = vpop.xlane.xlu0 %1128
          %1130 = vadd.xlane.f32.xlu0 %v1101
          %v1131 = vpop.xlane.xlu0 %1130
          %1132 = vadd.xlane.f32.xlu0 %v1102
          %v1133 = vpop.xlane.xlu0 %1132
          %1134 = vadd.xlane.f32.xlu0 %v1103
          %v1135 = vpop.xlane.xlu0 %1134
          %v1136 = vmul.f32 %v1105, 2.0
          %v1137 = vmul.f32 %v1107, 2.0
          %v1138 = vmul.f32 %v1109, 2.0
          %v1139 = vmul.f32 %v1111, 2.0
          %v1140 = vmul.f32 %v1113, 2.0
          %v1141 = vmul.f32 %v1115, 2.0
          %v1142 = vmul.f32 %v1117, 2.0
          %v1143 = vmul.f32 %v1119, 2.0
          %v1144 = vmul.f32 %v1121, 2.0
          %v1145 = vmul.f32 %v1123, 2.0
          %v1146 = vmul.f32 %v1125, 2.0
          %v1147 = vmul.f32 %v1127, 2.0
          %v1148 = vmul.f32 %v1129, 2.0
          %v1149 = vmul.f32 %v1131, 2.0
          %v1150 = vmul.f32 %v1133, 2.0
          %v1151 = vmul.f32 %v1135, 2.0
          %v1152 = vld [vmem:[#allocation2] sm:$0xff]
          %v1153 = vld [vmem:[#allocation2 + $0x8] sm:$0xff]
          %v1154 = vld [vmem:[#allocation2 + $0x10] sm:$0xff]
          %v1155 = vld [vmem:[#allocation2 + $0x18] sm:$0xff]
          %v1156 = vld [vmem:[#allocation2 + $0x20] sm:$0xff]
          %v1157 = vld [vmem:[#allocation2 + $0x28] sm:$0xff]
          %v1158 = vld [vmem:[#allocation2 + $0x30] sm:$0xff]
          %v1159 = vld [vmem:[#allocation2 + $0x38] sm:$0xff]
          %v1160 = vld [vmem:[#allocation2 + $0x40] sm:$0xff]
          %v1161 = vld [vmem:[#allocation2 + $0x48] sm:$0xff]
          %v1162 = vld [vmem:[#allocation2 + $0x50] sm:$0xff]
          %v1163 = vld [vmem:[#allocation2 + $0x58] sm:$0xff]
          %v1164 = vld [vmem:[#allocation2 + $0x60] sm:$0xff]
          %v1165 = vld [vmem:[#allocation2 + $0x68] sm:$0xff]
          %v1166 = vld [vmem:[#allocation2 + $0x70] sm:$0xff]
          %v1167 = vld [vmem:[#allocation2 + $0x78] sm:$0xff]
          %v1168 = vld [vmem:[#allocation3] sm:$0xff]
          %v1169 = vld [vmem:[#allocation3 + $0x8] sm:$0xff]
          %v1170 = vld [vmem:[#allocation3 + $0x10] sm:$0xff]
          %v1171 = vld [vmem:[#allocation3 + $0x18] sm:$0xff]
          %v1172 = vld [vmem:[#allocation3 + $0x20] sm:$0xff]
          %v1173 = vld [vmem:[#allocation3 + $0x28] sm:$0xff]
          %v1174 = vld [vmem:[#allocation3 + $0x30] sm:$0xff]
          %v1175 = vld [vmem:[#allocation3 + $0x38] sm:$0xff]
          %v1176 = vld [vmem:[#allocation3 + $0x40] sm:$0xff]
          %v1177 = vld [vmem:[#allocation3 + $0x48] sm:$0xff]
          %v1178 = vld [vmem:[#allocation3 + $0x50] sm:$0xff]
          %v1179 = vld [vmem:[#allocation3 + $0x58] sm:$0xff]
          %v1180 = vld [vmem:[#allocation3 + $0x60] sm:$0xff]
          %v1181 = vld [vmem:[#allocation3 + $0x68] sm:$0xff]
          %v1182 = vld [vmem:[#allocation3 + $0x70] sm:$0xff]
          %v1183 = vld [vmem:[#allocation3 + $0x78] sm:$0xff]
          %v1184 = vlog2.pop %v1168
          %v1185 = vmul.f32 %v1184, 0.6931472
          %v1186 = vlog2.pop %v1169
          %v1187 = vmul.f32 %v1186, 0.6931472
          %v1188 = vlog2.pop %v1170
          %v1189 = vmul.f32 %v1188, 0.6931472
          %v1190 = vlog2.pop %v1171
          %v1191 = vmul.f32 %v1190, 0.6931472
          %v1192 = vlog2.pop %v1172
          %v1193 = vmul.f32 %v1192, 0.6931472
          %v1194 = vlog2.pop %v1173
          %v1195 = vmul.f32 %v1194, 0.6931472
          %v1196 = vlog2.pop %v1174
          %v1197 = vmul.f32 %v1196, 0.6931472
          %v1198 = vlog2.pop %v1175
          %v1199 = vmul.f32 %v1198, 0.6931472
          %v1200 = vlog2.pop %v1176
          %v1201 = vmul.f32 %v1200, 0.6931472
          %v1202 = vlog2.pop %v1177
          %v1203 = vmul.f32 %v1202, 0.6931472
          %v1204 = vlog2.pop %v1178
          %v1205 = vmul.f32 %v1204, 0.6931472
          %v1206 = vlog2.pop %v1179
          %v1207 = vmul.f32 %v1206, 0.6931472
          %v1208 = vlog2.pop %v1180
          %v1209 = vmul.f32 %v1208, 0.6931472
          %v1210 = vlog2.pop %v1181
          %v1211 = vmul.f32 %v1210, 0.6931472
          %v1212 = vlog2.pop %v1182
          %v1213 = vmul.f32 %v1212, 0.6931472
          %v1214 = vlog2.pop %v1183
          %v1215 = vmul.f32 %v1214, 0.6931472
          %v1216 = vadd.f32 %v1152, %v1185
          %v1217 = vadd.f32 %v1153, %v1187
          %v1218 = vadd.f32 %v1154, %v1189
          %v1219 = vadd.f32 %v1155, %v1191
          %v1220 = vadd.f32 %v1156, %v1193
          %v1221 = vadd.f32 %v1157, %v1195
          %v1222 = vadd.f32 %v1158, %v1197
          %v1223 = vadd.f32 %v1159, %v1199
          %v1224 = vadd.f32 %v1160, %v1201
          %v1225 = vadd.f32 %v1161, %v1203
          %v1226 = vadd.f32 %v1162, %v1205
          %v1227 = vadd.f32 %v1163, %v1207
          %v1228 = vadd.f32 %v1164, %v1209
          %v1229 = vadd.f32 %v1165, %v1211
          %v1230 = vadd.f32 %v1166, %v1213
          %v1231 = vadd.f32 %v1167, %v1215
          %v1232 = vsub.f32 %v1216, %v1136
          %v1233 = vsub.f32 %v1217, %v1137
          %v1234 = vsub.f32 %v1218, %v1138
          %v1235 = vsub.f32 %v1219, %v1139
          %v1236 = vsub.f32 %v1220, %v1140
          %v1237 = vsub.f32 %v1221, %v1141
          %v1238 = vsub.f32 %v1222, %v1142
          %v1239 = vsub.f32 %v1223, %v1143
          %v1240 = vsub.f32 %v1224, %v1144
          %v1241 = vsub.f32 %v1225, %v1145
          %v1242 = vsub.f32 %v1226, %v1146
          %v1243 = vsub.f32 %v1227, %v1147
          %v1244 = vsub.f32 %v1228, %v1148
          %v1245 = vsub.f32 %v1229, %v1149
          %v1246 = vsub.f32 %v1230, %v1150
          %v1247 = vsub.f32 %v1231, %v1151
          %vm1248 = vcmp.lt.s32.totalorder %v583, 192
          %vm1249 = vcmp.lt.s32.totalorder %v584, 192
          %vm1250 = vcmp.lt.s32.totalorder %v585, 192
          %vm1251 = vcmp.lt.s32.totalorder %v586, 192
          %vm1252 = vcmp.lt.s32.totalorder %v587, 192
          %vm1253 = vcmp.lt.s32.totalorder %v588, 192
          %vm1254 = vcmp.lt.s32.totalorder %v589, 192
          %vm1255 = vcmp.lt.s32.totalorder %v590, 192
          %vm1256 = vcmp.lt.s32.totalorder %v591, 192
          %vm1257 = vcmp.lt.s32.totalorder %v592, 192
          %vm1258 = vcmp.lt.s32.totalorder %v593, 192
          %vm1259 = vcmp.lt.s32.totalorder %v594, 192
          %vm1260 = vcmp.lt.s32.totalorder %v595, 192
          %vm1261 = vcmp.lt.s32.totalorder %v596, 192
          %vm1262 = vcmp.lt.s32.totalorder %v597, 192
          %vm1263 = vcmp.lt.s32.totalorder %v598, 192
          %v1264 = vsel %vm1248, %v1232, 0.0
          %v1265 = vsel %vm1249, %v1233, 0.0
          %v1266 = vsel %vm1250, %v1234, 0.0
          %v1267 = vsel %vm1251, %v1235, 0.0
          %v1268 = vsel %vm1252, %v1236, 0.0
          %v1269 = vsel %vm1253, %v1237, 0.0
          %v1270 = vsel %vm1254, %v1238, 0.0
          %v1271 = vsel %vm1255, %v1239, 0.0
          %v1272 = vsel %vm1256, %v1240, 0.0
          %v1273 = vsel %vm1257, %v1241, 0.0
          %v1274 = vsel %vm1258, %v1242, 0.0
          %v1275 = vsel %vm1259, %v1243, 0.0
          %v1276 = vsel %vm1260, %v1244, 0.0
          %v1277 = vsel %vm1261, %v1245, 0.0
          %v1278 = vsel %vm1262, %v1246, 0.0
          %v1279 = vsel %vm1263, %v1247, 0.0
          %1280 = vst.msk [vmem:[%s280] sm:$0xff] %vm987, %v1264
          %1281 = vst.msk [vmem:[%s280 + $0x8] sm:$0xff] %vm987, %v1265
          %1282 = vst.msk [vmem:[%s280 + $0x10] sm:$0xff] %vm987, %v1266
          %1283 = vst.msk [vmem:[%s280 + $0x18] sm:$0xff] %vm987, %v1267
          %1284 = vst.msk [vmem:[%s280 + $0x20] sm:$0xff] %vm987, %v1268
          %1285 = vst.msk [vmem:[%s280 + $0x28] sm:$0xff] %vm987, %v1269
          %1286 = vst.msk [vmem:[%s280 + $0x30] sm:$0xff] %vm987, %v1270
          %1287 = vst.msk [vmem:[%s280 + $0x38] sm:$0xff] %vm987, %v1271
          %1288 = vst.msk [vmem:[%s280 + $0x40] sm:$0xff] %vm987, %v1272
          %1289 = vst.msk [vmem:[%s280 + $0x48] sm:$0xff] %vm987, %v1273
          %1290 = vst.msk [vmem:[%s280 + $0x50] sm:$0xff] %vm987, %v1274
          %1291 = vst.msk [vmem:[%s280 + $0x58] sm:$0xff] %vm987, %v1275
          %1292 = vst.msk [vmem:[%s280 + $0x60] sm:$0xff] %vm987, %v1276
          %1293 = vst.msk [vmem:[%s280 + $0x68] sm:$0xff] %vm987, %v1277
          %1294 = vst.msk [vmem:[%s280 + $0x70] sm:$0xff] %vm987, %v1278
          %1295 = vst.msk [vmem:[%s280 + $0x78] sm:$0xff] %vm987, %v1279
        $region52: #{tpu_custom_call.1} parent=31 // pred_fallthru
          _
        %s1296 = smul.u32 16, %s24
        %p1297 = scmp.lt.s32.totalorder %s1296, 31
        %s1298 = scalar_select %p1297, %s1296, 31
        %s1299 = smul.addr %s1298, 8
        %s1300 = scalar_lea.vmem %s3, %s1299
        // Predicated region
        $region53: #{tpu_custom_call.1} parent=31 // pred_check
          %p1301 = pneg %p128
        $region54: #{tpu_custom_call.1} parent=31 // pred_check_branch
          %1303 = sbr.rel (%p1301) target = $region56
        $region55: #{tpu_custom_call.1} parent=31 // pred_region
          %s1304 = smul.u32 16, %s24
        $region56: #{tpu_custom_call.1} parent=31 // pred_fallthru
          _
      $region32: #{tpu_custom_call.1} parent=5 // pred_fallthru
        _
      %p1305 = scmp.le.s32.totalorder 2, %s15
      // Predicated region
      $region57: #{tpu_custom_call.1} parent=5 // pred_check
        %p1306 = pneg %p1305
      $region58: #{tpu_custom_call.1} parent=5 // pred_check_branch
        %1308 = sbr.rel (%p1306) target = $region60
      $region59: #{tpu_custom_call.1} parent=5 // pred_region
        %s1309 = ssub.s32 %s15, 2
        // Predicated region
        $region61: #{tpu_custom_call.1} parent=59 // pred_check
          %p1310 = pneg %p134
        $region62: #{tpu_custom_call.1} parent=59 // pred_check_branch
          %1312 = sbr.rel (%p1310) target = $region64
        $region63: #{tpu_custom_call.1} parent=59 // pred_region
          %s1313 = smul.u32 16, %s26
          %p1314 = scmp.lt.s32.totalorder %s1313, 31
          %s1315 = scalar_select %p1314, %s1313, 31
          %s1316 = smul.addr %s1315, 8
          %s1317 = scalar_lea.vmem %s3, %s1316
        $region64: #{tpu_custom_call.1} parent=59 // pred_fallthru
          _
      $region60: #{tpu_custom_call.1} parent=5 // pred_fallthru
        _
    $region6: #{tpu_custom_call.1} parent=1 // loop_footer
      %s19 = sadd.s32 1, %s15
    $region7: #{tpu_custom_call.1} parent=1 // loop_footer_branch
      %14 = sbr.rel target = $region3
    $region8: #{tpu_custom_call.1} parent=1 // loop_exit
      _
    %1318 = vsyncpa [#allocation5], 1
    %s1319 = scalar_lea.sflag [#allocation5], 1
    %1320 = vsyncpa %s1319, 1
    %1321 = vsyncpa [#allocation7], 1
    %s1322 = scalar_lea.sflag [#allocation7], 1
    %1323 = vsyncpa %s1322, 1

</llo_original>
